<compile_context>
chip_gen: v7x
topology: tpu7x:2x2x1
jax: 0.10.0
libtpu: 0.0.40
codegen_flags: <defaults>
</compile_context>

<pallas_src>
import functools

import jax
import jax.numpy as jnp
from jax import lax
from jax.experimental import pallas as pl
from jax.experimental.pallas import tpu as pltpu

LANE = 128
SUBLANE = 8


def _round_up(x, m):
    return ((x + m - 1) // m) * m


def _iou_partial_kernel(o_ref, t_ref, inter_out_ref, union_out_ref,
                        acc_inter, acc_union,
                        *, total, tile_rows, inner, threshold, need_mask):
    p = pl.program_id(0)   # parallel slice (megacore-shardable)
    j = pl.program_id(1)   # reduction steps within the slice

    @pl.when(j == 0)
    def _init():
        acc_inter[...] = jnp.zeros_like(acc_inter)
        acc_union[...] = jnp.zeros_like(acc_union)

    o = o_ref[...].astype(jnp.float32)
    t = t_ref[...].astype(jnp.float32)

    prob = jax.nn.sigmoid(o)                       # activation='sigmoid'
    if threshold is not None:                      # optional binarization
        prob = (prob > threshold).astype(jnp.float32)

    if need_mask:
        # Mask out pad elements / ragged-last-block garbage / fully-OOB
        # (clamped) grid steps, based on the *logical* flat element index.
        tile_elems = tile_rows * LANE
        base = (p * inner + j) * tile_elems
        flat = (base
                + lax.broadcasted_iota(jnp.int32, (tile_rows, LANE), 0) * LANE
                + lax.broadcasted_iota(jnp.int32, (tile_rows, LANE), 1))
        mask = flat < total
        prob = jnp.where(mask, prob, 0.0)
        t = jnp.where(mask, t, 0.0)

    # Vector-shaped accumulation: pure VPU vreg adds, no per-step lane reduce.
    inter_tile = (t * prob).reshape(tile_rows // SUBLANE, SUBLANE, LANE)
    union_tile = (t + prob).reshape(tile_rows // SUBLANE, SUBLANE, LANE)
    acc_inter[...] += jnp.sum(inter_tile, axis=0)
    acc_union[...] += jnp.sum(union_tile, axis=0)

    @pl.when(j == pl.num_programs(1) - 1)
    def _finalize():
        inter_out_ref[0] = acc_inter[...]
        union_out_ref[0] = acc_union[...]


def iou_loss(outputs, targets, *, eps=1e-7, threshold=None, tile_rows=1024,
             num_parallel=2):
    """1 - IoU(sigmoid(outputs), targets), computed with a Pallas TPU kernel."""
    assert outputs.shape == targets.shape
    assert tile_rows % SUBLANE == 0
    total = int(outputs.size)

    # Keep native dtypes; upcast to f32 inside the kernel tile.
    o = outputs.reshape(-1)
    t = targets.reshape(-1)

    # Pad only to a multiple of 8*128 (<= 1023 elements, often zero); padded
    # values are excluded by the in-kernel mask, so the pad value is irrelevant.
    padded = _round_up(total, SUBLANE * LANE)
    pad = padded - total
    if pad:
        o = jnp.concatenate([o, jnp.zeros((pad,), o.dtype)])
        t = jnp.concatenate([t, jnp.zeros((pad,), t.dtype)])

    rows = padded // LANE                      # multiple of 8
    o2 = o.reshape(rows, LANE)
    t2 = t.reshape(rows, LANE)

    tr = min(tile_rows, rows)                  # multiple of 8
    num_blocks = pl.cdiv(rows, tr)
    P = num_parallel if num_blocks >= num_parallel else 1
    inner = pl.cdiv(num_blocks, P)
    need_mask = (P * inner * tr * LANE != total)

    def in_map(p, j):
        blk = p * inner + j
        # Clamp fully-out-of-range grid steps to a valid block; their
        # contribution is zeroed by the mask.
        return (jnp.minimum(blk, num_blocks - 1), 0)

    kernel = functools.partial(
        _iou_partial_kernel, total=total, tile_rows=tr, inner=inner,
        threshold=threshold, need_mask=need_mask)

    bytes_in = o2.size * o2.dtype.itemsize + t2.size * t2.dtype.itemsize
    cost = pl.CostEstimate(
        flops=5 * total,
        transcendentals=total,
        bytes_accessed=bytes_in + 2 * P * SUBLANE * LANE * 4,
    )

    inter_parts, union_parts = pl.pallas_call(
        kernel,
        out_shape=(jax.ShapeDtypeStruct((P, SUBLANE, LANE), jnp.float32),
                   jax.ShapeDtypeStruct((P, SUBLANE, LANE), jnp.float32)),
        grid_spec=pltpu.PrefetchScalarGridSpec(
            num_scalar_prefetch=0,
            grid=(P, inner),
            in_specs=[
                pl.BlockSpec((tr, LANE), in_map),
                pl.BlockSpec((tr, LANE), in_map),
            ],
            out_specs=[
                pl.BlockSpec((1, SUBLANE, LANE), lambda p, j: (p, 0, 0)),
                pl.BlockSpec((1, SUBLANE, LANE), lambda p, j: (p, 0, 0)),
            ],
            scratch_shapes=[
                pltpu.VMEM((SUBLANE, LANE), jnp.float32),  # intersection acc
                pltpu.VMEM((SUBLANE, LANE), jnp.float32),  # union (t+p) acc
            ],
        ),
        compiler_params=pltpu.CompilerParams(
            dimension_semantics=("parallel", "arbitrary"),
        ),
        cost_estimate=cost,
    )(o2, t2)

    # Trivial final combine of the per-slice partials (2 * P * 1024 floats).
    inter = jnp.sum(inter_parts, dtype=jnp.float32)
    union = jnp.sum(union_parts, dtype=jnp.float32)
    iou = inter / (union - inter + eps)
    return 1.0 - iou


def _iou_loss_ref(outputs, targets, eps=1e-7, threshold=None):
    p = jax.nn.sigmoid(outputs.astype(jnp.float32))
    if threshold is not None:
        p = (p > threshold).astype(jnp.float32)
    t = targets.astype(jnp.float32)
    inter = jnp.sum(t * p)
    union = jnp.sum(t) + jnp.sum(p)
    return 1.0 - inter / (union - inter + eps)


if __name__ == "__main__":
    key = jax.random.PRNGKey(0)
    k_out, k_tgt = jax.random.split(key)

    # Primary NCHW example (small shapes).
    outputs = jax.random.normal(k_out, (2, 4, 16, 16), dtype=jnp.float32)
    targets = jax.random.bernoulli(k_tgt, 0.5, (2, 4, 16, 16)).astype(jnp.float32)

    loss = iou_loss(outputs, targets)
    jax.block_until_ready(loss)
    ref = _iou_loss_ref(outputs, targets)
    assert jnp.allclose(loss, ref, atol=1e-5, rtol=1e-5), (loss, ref)

    # Extra small checks: ragged size (pad + mask path) and multi-block /
    # parallel-split / clamped-grid paths (still tiny).
    k1, k2, k3, k4 = jax.random.split(key, 4)

    o_r = jax.random.normal(k1, (2, 3, 17, 19), dtype=jnp.float32)
    t_r = jax.random.bernoulli(k2, 0.3, (2, 3, 17, 19)).astype(jnp.float32)
    l_r = iou_loss(o_r, t_r)
    jax.block_until_ready(l_r)
    assert jnp.allclose(l_r, _iou_loss_ref(o_r, t_r), atol=1e-5, rtol=1e-5)

    o_m = jax.random.normal(k3, (1, 1, 72, 128), dtype=jnp.float32)
    t_m = jax.random.bernoulli(k4, 0.7, (1, 1, 72, 128)).astype(jnp.float32)
    l_m = iou_loss(o_m, t_m, tile_rows=32)   # 3 blocks, P=2, clamp + mask
    jax.block_until_ready(l_m)
    assert jnp.allclose(l_m, _iou_loss_ref(o_m, t_m), atol=1e-5, rtol=1e-5)

    print("KERNEL_OK")
</pallas_src>

<mosaic_0001>
module attributes {stable_mosaic.version = 11 : i64} {
  func.func @_iou_partial_kernel(%arg0: i32, %arg1: i32, %arg2: memref<16x128xf32, #tpu.memory_space<vmem>>, %arg3: memref<16x128xf32, #tpu.memory_space<vmem>>, %arg4: memref<1x8x128xf32, #tpu.memory_space<vmem>>, %arg5: memref<1x8x128xf32, #tpu.memory_space<vmem>>, %arg6: memref<8x128xf32, #tpu.memory_space<vmem>>, %arg7: memref<8x128xf32, #tpu.memory_space<vmem>>) attributes {dimension_semantics = [#tpu.dimension_semantics<parallel>, #tpu.dimension_semantics<arbitrary>], iteration_bounds = array<i64: 1, 1>, scalar_prefetch = 0 : i64, scratch_operands = 2 : i64, tpu.core_type = #tpu.core_type<tc>, window_params = [{transform_indices = @transform_0, window_bounds = array<i64: 16, 128>}, {transform_indices = @transform_1, window_bounds = array<i64: 16, 128>}, {transform_indices = @transform_2, window_bounds = array<i64: 1, 8, 128>}, {transform_indices = @transform_3, window_bounds = array<i64: 1, 8, 128>}]} {
    %c0_i32 = arith.constant 0 : i32
    %0 = arith.cmpi eq, %arg1, %c0_i32 : i32
    %1 = arith.extui %0 : i1 to i32
    %c0_i32_0 = arith.constant 0 : i32
    %2 = arith.cmpi ne, %1, %c0_i32_0 : i32
    scf.if %2 {
      %cst_16 = arith.constant 0.000000e+00 : f32
      %25 = vector.broadcast %cst_16 : f32 to vector<8x128xf32>
      %c0_17 = arith.constant 0 : index
      %c0_18 = arith.constant 0 : index
      %26 = vector.load %arg6[%c0_17, %c0_18] : memref<8x128xf32, #tpu.memory_space<vmem>>, vector<8x128xf32>
      tpu.vector_store %arg6[%c0_17, %c0_18], %25 {strides = array<i32>} : memref<8x128xf32, #tpu.memory_space<vmem>>, vector<8x128xf32>,
      %cst_19 = arith.constant 0.000000e+00 : f32
      %27 = vector.broadcast %cst_19 : f32 to vector<8x128xf32>
      %c0_20 = arith.constant 0 : index
      %c0_21 = arith.constant 0 : index
      %28 = vector.load %arg7[%c0_20, %c0_21] : memref<8x128xf32, #tpu.memory_space<vmem>>, vector<8x128xf32>
      tpu.vector_store %arg7[%c0_20, %c0_21], %27 {strides = array<i32>} : memref<8x128xf32, #tpu.memory_space<vmem>>, vector<8x128xf32>,
    } else {
    }
    %c0 = arith.constant 0 : index
    %c0_1 = arith.constant 0 : index
    %3 = vector.load %arg2[%c0, %c0_1] : memref<16x128xf32, #tpu.memory_space<vmem>>, vector<16x128xf32>
    %c0_2 = arith.constant 0 : index
    %c0_3 = arith.constant 0 : index
    %4 = vector.load %arg3[%c0_2, %c0_3] : memref<16x128xf32, #tpu.memory_space<vmem>>, vector<16x128xf32>
    %5 = arith.negf %3 : vector<16x128xf32>
    %6 = math.exp %5 : vector<16x128xf32>
    %cst = arith.constant 1.000000e+00 : f32
    %7 = vector.broadcast %cst : f32 to vector<16x128xf32>
    %8 = arith.addf %7, %6 : vector<16x128xf32>
    %9 = arith.divf %7, %8 : vector<16x128xf32>
    %10 = arith.mulf %4, %9 : vector<16x128xf32>
    %11 = vector.shape_cast %10 : vector<16x128xf32> to vector<2x8x128xf32>
    %12 = arith.addf %4, %9 : vector<16x128xf32>
    %13 = vector.shape_cast %12 : vector<16x128xf32> to vector<2x8x128xf32>
    %c0_4 = arith.constant 0 : index
    %c0_5 = arith.constant 0 : index
    %14 = vector.load %arg6[%c0_4, %c0_5] : memref<8x128xf32, #tpu.memory_space<vmem>>, vector<8x128xf32>
    %cst_6 = arith.constant dense<0.000000e+00> : vector<8x128xf32>
    %15 = vector.multi_reduction <add>, %11, %cst_6 [0] : vector<2x8x128xf32> to vector<8x128xf32>
    %16 = arith.addf %14, %15 : vector<8x128xf32>
    %c0_7 = arith.constant 0 : index
    %c0_8 = arith.constant 0 : index
    %17 = vector.load %arg6[%c0_7, %c0_8] : memref<8x128xf32, #tpu.memory_space<vmem>>, vector<8x128xf32>
    tpu.vector_store %arg6[%c0_7, %c0_8], %16 {strides = array<i32>} : memref<8x128xf32, #tpu.memory_space<vmem>>, vector<8x128xf32>,
    %c0_9 = arith.constant 0 : index
    %c0_10 = arith.constant 0 : index
    %18 = vector.load %arg7[%c0_9, %c0_10] : memref<8x128xf32, #tpu.memory_space<vmem>>, vector<8x128xf32>
    %cst_11 = arith.constant dense<0.000000e+00> : vector<8x128xf32>
    %19 = vector.multi_reduction <add>, %13, %cst_11 [0] : vector<2x8x128xf32> to vector<8x128xf32>
    %20 = arith.addf %18, %19 : vector<8x128xf32>
    %c0_12 = arith.constant 0 : index
    %c0_13 = arith.constant 0 : index
    %21 = vector.load %arg7[%c0_12, %c0_13] : memref<8x128xf32, #tpu.memory_space<vmem>>, vector<8x128xf32>
    tpu.vector_store %arg7[%c0_12, %c0_13], %20 {strides = array<i32>} : memref<8x128xf32, #tpu.memory_space<vmem>>, vector<8x128xf32>,
    %c0_i32_14 = arith.constant 0 : i32
    %22 = arith.cmpi eq, %arg1, %c0_i32_14 : i32
    %23 = arith.extui %22 : i1 to i32
    %c0_i32_15 = arith.constant 0 : i32
    %24 = arith.cmpi ne, %23, %c0_i32_15 : i32
    scf.if %24 {
      %c0_16 = arith.constant 0 : index
      %c0_17 = arith.constant 0 : index
      %25 = vector.load %arg6[%c0_16, %c0_17] : memref<8x128xf32, #tpu.memory_space<vmem>>, vector<8x128xf32>
      %c0_18 = arith.constant 0 : index
      %c0_19 = arith.constant 0 : index
      %c0_20 = arith.constant 0 : index
      %26 = vector.load %arg4[%c0_18, %c0_19, %c0_20] : memref<1x8x128xf32, #tpu.memory_space<vmem>>, vector<1x8x128xf32>
      %27 = vector.shape_cast %26 : vector<1x8x128xf32> to vector<8x128xf32>
      %28 = vector.shape_cast %25 : vector<8x128xf32> to vector<1x8x128xf32>
      tpu.vector_store %arg4[%c0_18, %c0_19, %c0_20], %28 {strides = array<i32>} : memref<1x8x128xf32, #tpu.memory_space<vmem>>, vector<1x8x128xf32>,
      %c0_21 = arith.constant 0 : index
      %c0_22 = arith.constant 0 : index
      %29 = vector.load %arg7[%c0_21, %c0_22] : memref<8x128xf32, #tpu.memory_space<vmem>>, vector<8x128xf32>
      %c0_23 = arith.constant 0 : index
      %c0_24 = arith.constant 0 : index
      %c0_25 = arith.constant 0 : index
      %30 = vector.load %arg5[%c0_23, %c0_24, %c0_25] : memref<1x8x128xf32, #tpu.memory_space<vmem>>, vector<1x8x128xf32>
      %31 = vector.shape_cast %30 : vector<1x8x128xf32> to vector<8x128xf32>
      %32 = vector.shape_cast %29 : vector<8x128xf32> to vector<1x8x128xf32>
      tpu.vector_store %arg5[%c0_23, %c0_24, %c0_25], %32 {strides = array<i32>} : memref<1x8x128xf32, #tpu.memory_space<vmem>>, vector<1x8x128xf32>,
    } else {
    }
    return
  }
  func.func @transform_0(%arg0: i32, %arg1: i32) -> (i32, i32) {
    %c1_i32 = arith.constant 1 : i32
    %0 = arith.muli %arg0, %c1_i32 : i32
    %1 = arith.addi %0, %arg1 : i32
    %c0_i32 = arith.constant 0 : i32
    %2 = arith.minsi %1, %c0_i32 : i32
    %c0_i32_0 = arith.constant 0 : i32
    %c0_i32_1 = arith.constant 0 : i32
    return %2, %c0_i32_0 : i32, i32
  }
  func.func @transform_1(%arg0: i32, %arg1: i32) -> (i32, i32) {
    %c1_i32 = arith.constant 1 : i32
    %0 = arith.muli %arg0, %c1_i32 : i32
    %1 = arith.addi %0, %arg1 : i32
    %c0_i32 = arith.constant 0 : i32
    %2 = arith.minsi %1, %c0_i32 : i32
    %c0_i32_0 = arith.constant 0 : i32
    %c0_i32_1 = arith.constant 0 : i32
    return %2, %c0_i32_0 : i32, i32
  }
  func.func @transform_2(%arg0: i32, %arg1: i32) -> (i32, i32, i32) {
    %c0_i32 = arith.constant 0 : i32
    %c0_i32_0 = arith.constant 0 : i32
    %c0_i32_1 = arith.constant 0 : i32
    return %arg0, %c0_i32, %c0_i32_0 : i32, i32, i32
  }
  func.func @transform_3(%arg0: i32, %arg1: i32) -> (i32, i32, i32) {
    %c0_i32 = arith.constant 0 : i32
    %c0_i32_0 = arith.constant 0 : i32
    %c0_i32_1 = arith.constant 0 : i32
    return %arg0, %c0_i32, %c0_i32_0 : i32, i32, i32
  }
}

</mosaic_0001>

<llo_original>
// kernel: tpu_custom_call.1
$region0: #{tpu_custom_call.1}
  #allocation0 [shape = 'u32[]', space=smem, size = 0x4, offset = 0x4, fixed_abs, tag = 'smem constant byte address 0x4 - core index']
  #allocation1 [shape = 'u32[144,128]{1,0:T(1,128)}', space=vmem, size = 0x12000, scoped, tag = 'internal scratch']
  #allocation2 [shape = 'f32[8,128]{1,0:T(8,128)}', space=vmem, size = 0x1000, scoped, tag = 'scratch operand']
  #allocation3 [shape = 'f32[8,128]{1,0:T(8,128)}', space=vmem, size = 0x1000, scoped, tag = 'scratch operand']
  %s0 = inlined_call_operand.hbm [shape: f32[16,128], index: 0, kind: input, shape index: {}]
  %s1 = inlined_call_operand.hbm [shape: f32[16,128], index: 1, kind: input, shape index: {}]
  %s2 = inlined_call_operand.hbm [shape: f32[1,8,128], index: 2, kind: output, shape index: {0}]
  %s3 = inlined_call_operand.hbm [shape: f32[1,8,128], index: 3, kind: output, shape index: {1}]
  %4 = xla_tuple %s2, %s3
  %s5 = sld [smem:[#allocation0]]
  $region42: #{tpu_custom_call.1} parent=0
    _
  %s7 = ssub.s32 1, %s5
  %s8 = scalar_select 0, %s7, %s5
  $region1: #{tpu_custom_call.1} parent=0
    #allocation4 [shape = 'u8[8192]{0}', space=vmem, size = 0x2000, scoped, tag = 'input window, operand 0, single buffered']
    #allocation5 [shape = 's32[1]{0}', space=sflag, size = 0x4, scoped, tag = 'scoped memory for tpu_custom_call.1']
    #allocation6 [shape = 's32[1]{0}', space=sflag, size = 0x4, scoped, tag = 'scoped memory for tpu_custom_call.1']
    #allocation7 [shape = 'u8[8192]{0}', space=vmem, size = 0x2000, scoped, tag = 'input window, operand 1, single buffered']
    #allocation8 [shape = 's32[1]{0}', space=sflag, size = 0x4, scoped, tag = 'scoped memory for tpu_custom_call.1']
    #allocation9 [shape = 'u8[4096]{0}', space=vmem, size = 0x1000, scoped, tag = 'output window, operand 0, single buffered']
    #allocation10 [shape = 'u8[4096]{0}', space=vmem, size = 0x1000, scoped, tag = 'output window, operand 1, single buffered']
    #allocation11 [shape = 's32[1]{0}', space=sflag, size = 0x4, scoped, tag = 'scoped memory for tpu_custom_call.1']
    %9 = vsyncpa [#allocation5], 0
    %10 = vsyncpa [#allocation8], 0
    %11 = vsyncpa [#allocation6], 0
    %12 = vsyncpa [#allocation11], 0
    // Predicated region
    $region2: #{tpu_custom_call.1} parent=1 // pred_check
      _
    $region3: #{tpu_custom_call.1} parent=1 // pred_check_branch
      %14 = sbr.rel (0) target = $region5
    $region4: #{tpu_custom_call.1} parent=1 // pred_region
      %s15 = sadd.s32 0, 0
      %p16 = scmp.lt.s32.totalorder %s15, 0
      %s17 = scalar_select %p16, %s15, 0
      %s18 = smul.u32 2, %s17
      %s20 = ssub.s32 256, 256
      %21 = vsyncadd [#allocation5], %s20
      %s22 = smul.addr %s18, 128
      %s23 = scalar_lea.hbm %s0, %s22
      %s24 = sshll.u32 [#allocation4], 4
      %s25 = int_to_ptr.vmem [resolvable:$true] %s24
      %30 = dma.hbm_to_vmem [thread:$0]  %s23, 256, %s25, [#allocation5], 128, 128, 8
    $region5: #{tpu_custom_call.1} parent=1 // pred_fallthru
      _
    // Predicated region
    $region6: #{tpu_custom_call.1} parent=1 // pred_check
      _
    $region7: #{tpu_custom_call.1} parent=1 // pred_check_branch
      %32 = sbr.rel (0) target = $region9
    $region8: #{tpu_custom_call.1} parent=1 // pred_region
      %s33 = sadd.s32 0, 0
      %p34 = scmp.lt.s32.totalorder %s33, 0
      %s35 = scalar_select %p34, %s33, 0
      %s36 = smul.u32 2, %s35
      %s38 = ssub.s32 256, 256
      %39 = vsyncadd [#allocation8], %s38
      %s40 = smul.addr %s36, 128
      %s41 = scalar_lea.hbm %s1, %s40
      %s42 = sshll.u32 [#allocation7], 4
      %s43 = int_to_ptr.vmem [resolvable:$true] %s42
      %48 = dma.hbm_to_vmem [thread:$0]  %s41, 256, %s43, [#allocation8], 128, 128, 8
    $region9: #{tpu_custom_call.1} parent=1 // pred_fallthru
      _
    // Predicated region
    $region10: #{tpu_custom_call.1} parent=1 // pred_check
      _
    $region11: #{tpu_custom_call.1} parent=1 // pred_check_branch
      %50 = sbr.rel (0) target = $region13
    $region12: #{tpu_custom_call.1} parent=1 // pred_region
      %51 = dma.done [#allocation5], 256
    $region13: #{tpu_custom_call.1} parent=1 // pred_fallthru
      _
    // Predicated region
    $region14: #{tpu_custom_call.1} parent=1 // pred_check
      _
    $region15: #{tpu_custom_call.1} parent=1 // pred_check_branch
      %53 = sbr.rel (0) target = $region17
    $region16: #{tpu_custom_call.1} parent=1 // pred_region
      %54 = dma.done [#allocation8], 256
    $region17: #{tpu_custom_call.1} parent=1 // pred_fallthru
      _
    %s55 = sadd.s32 0, 0
    %p56 = scmp.lt.s32.totalorder %s55, 0
    %s57 = scalar_select %p56, %s55, 0
    %s58 = smul.u32 2, %s57
    %s59 = sadd.s32 0, 0
    %p60 = scmp.lt.s32.totalorder %s59, 0
    %s61 = scalar_select %p60, %s59, 0
    %s62 = smul.u32 2, %s61
    %p63 = scmp.eq.s32.totalorder 0, 0
    // Predicated region
    $region18: #{tpu_custom_call.1} parent=1 // pred_check
      %p64 = pneg %p63
    $region19: #{tpu_custom_call.1} parent=1 // pred_check_branch
      %66 = sbr.rel (%p64) target = $region21
    $region20: #{tpu_custom_call.1} parent=1 // pred_region
      %67 = vst [vmem:[#allocation2] sm:$0xff] 0.0
      %68 = vst [vmem:[#allocation3] sm:$0xff] 0.0
    $region21: #{tpu_custom_call.1} parent=1 // pred_fallthru
      _
    %v69 = vld [vmem:[#allocation4] sm:$0xff]
    %v70 = vld [vmem:[#allocation4 + $0x8] sm:$0xff]
    %v71 = vld [vmem:[#allocation7] sm:$0xff]
    %v72 = vld [vmem:[#allocation7 + $0x8] sm:$0xff]
    %v73 = vxor.u32 %v69, 2147483648
    %v74 = vxor.u32 %v70, 2147483648
    %v75 = vmul.f32 %v73, 1.442695
    %v76 = vpow.pop %v75
    %v77 = vmul.f32 %v74, 1.442695
    %v78 = vpow.pop %v77
    %v79 = vadd.f32 %v76, 1.0
    %v80 = vadd.f32 %v78, 1.0
    %v81 = vrcp.pop %v79
    %v82 = vmul.f32 1.0, %v81
    %v83 = vrcp.pop %v80
    %v84 = vmul.f32 1.0, %v83
    %v85 = vmul.f32 %v71, %v82
    %v86 = vmul.f32 %v72, %v84
    %v87 = vadd.f32 %v71, %v82
    %v88 = vadd.f32 %v72, %v84
    %v89 = vld [vmem:[#allocation2] sm:$0xff]
    %v90 = vadd.f32 %v85, %v86
    %v91 = vadd.f32 %v89, %v90
    %92 = vst [vmem:[#allocation2] sm:$0xff] %v91
    %v93 = vld [vmem:[#allocation3] sm:$0xff]
    %v94 = vadd.f32 %v87, %v88
    %v95 = vadd.f32 %v93, %v94
    %96 = vst [vmem:[#allocation3] sm:$0xff] %v95
    // Predicated region
    $region22: #{tpu_custom_call.1} parent=1 // pred_check
      %p97 = pneg %p63
    $region23: #{tpu_custom_call.1} parent=1 // pred_check_branch
      %99 = sbr.rel (%p97) target = $region25
    $region24: #{tpu_custom_call.1} parent=1 // pred_region
      %v100 = vld [vmem:[#allocation2] sm:$0xff]
      %101 = vst [vmem:[#allocation9] sm:$0xff] %v100
      %v102 = vld [vmem:[#allocation3] sm:$0xff]
      %103 = vst [vmem:[#allocation10] sm:$0xff] %v102
    $region25: #{tpu_custom_call.1} parent=1 // pred_fallthru
      _
    // Predicated region
    $region26: #{tpu_custom_call.1} parent=1 // pred_check
      _
    $region27: #{tpu_custom_call.1} parent=1 // pred_check_branch
      %105 = sbr.rel (0) target = $region29
    $region28: #{tpu_custom_call.1} parent=1 // pred_region
      %s107 = ssub.s32 128, 128
      %108 = vsyncadd [#allocation6], %s107
      %s110 = sshll.u32 [#allocation9], 4
      %s111 = int_to_ptr.vmem [resolvable:$true] %s110
      %113 = dma.vmem_to_hbm [thread:$0]  %s111, 128, %s2, [#allocation6]
    $region29: #{tpu_custom_call.1} parent=1 // pred_fallthru
      _
    // Predicated region
    $region30: #{tpu_custom_call.1} parent=1 // pred_check
      _
    $region31: #{tpu_custom_call.1} parent=1 // pred_check_branch
      %115 = sbr.rel (0) target = $region33
    $region32: #{tpu_custom_call.1} parent=1 // pred_region
      %s117 = ssub.s32 128, 128
      %118 = vsyncadd [#allocation11], %s117
      %s120 = sshll.u32 [#allocation10], 4
      %s121 = int_to_ptr.vmem [resolvable:$true] %s120
      %123 = dma.vmem_to_hbm [thread:$0]  %s121, 128, %s3, [#allocation11]
    $region33: #{tpu_custom_call.1} parent=1 // pred_fallthru
      _
    // Predicated region
    $region34: #{tpu_custom_call.1} parent=1 // pred_check
      _
    $region35: #{tpu_custom_call.1} parent=1 // pred_check_branch
      %125 = sbr.rel (0) target = $region37
    $region36: #{tpu_custom_call.1} parent=1 // pred_region
      %126 = dma.done [#allocation6], 128
    $region37: #{tpu_custom_call.1} parent=1 // pred_fallthru
      _
    // Predicated region
    $region38: #{tpu_custom_call.1} parent=1 // pred_check
      _
    $region39: #{tpu_custom_call.1} parent=1 // pred_check_branch
      %128 = sbr.rel (0) target = $region41
    $region40: #{tpu_custom_call.1} parent=1 // pred_region
      %129 = dma.done [#allocation11], 128
    $region41: #{tpu_custom_call.1} parent=1 // pred_fallthru
      _
    %130 = vsyncpa [#allocation5], 1
    %131 = vsyncpa [#allocation8], 1
    %132 = vsyncpa [#allocation6], 1
    %133 = vsyncpa [#allocation11], 1

</llo_original>
